<compile_context>
chip_gen: v7x
topology: tpu7x:2x2x1
jax: 0.10.0
libtpu: 0.0.40
codegen_flags: <defaults>
</compile_context>

<pallas_src>
import functools

import jax
import jax.numpy as jnp
from jax.experimental import pallas as pl
from jax.experimental.pallas import tpu as pltpu


LN_EPS = 1e-5
LOG_STD_MIN = -20.0
LOG_STD_MAX = 2.0
LANE = 128
SUBLANE = 8


def _round_up(x, m):
    return ((x + m - 1) // m) * m


def _cdiv(a, b):
    return -(-a // b)


def actor_kernel(x_ref, w1_ref, b1_ref, g1_ref, be1_ref, wh_ref, bh_ref,
                 out_ref, *, h_valid, std_off):
    """Fused Actor forward: Linear1 -> ReLU -> LayerNorm -> packed-head Linear."""
    hp = w1_ref.shape[1]                 # padded hidden width (multiple of 128)
    inv_h = 1.0 / h_valid

    # ---- Layer 1: Linear (bf16 MXU, f32 accumulate) -> ReLU -> LayerNorm -----
    h = jnp.dot(x_ref[...], w1_ref[...],
                preferred_element_type=jnp.float32) + b1_ref[...]
    h = jnp.maximum(h, 0.0)              # padded lanes stay exactly 0

    mu = jnp.sum(h, axis=-1, keepdims=True) * inv_h
    d = h - mu
    if hp != h_valid:                    # static: mask padded lanes out of var
        lane_h = jax.lax.broadcasted_iota(jnp.int32, h.shape, 1)
        d = jnp.where(lane_h < h_valid, d, 0.0)
    var = jnp.sum(d * d, axis=-1, keepdims=True) * inv_h   # two-pass variance
    inv = jax.lax.rsqrt(var + LN_EPS)    # EUP rsqrt (free slot)
    hn = d * (inv * g1_ref[...]) + be1_ref[...]            # gamma/beta pad = 0

    # ---- Packed heads (Layer-2 folded offline): one lane-dense matmul --------
    s = jnp.dot(hn.astype(wh_ref.dtype), wh_ref[...],
                preferred_element_type=jnp.float32) + bh_ref[...]
    lane = jax.lax.broadcasted_iota(jnp.int32, s.shape, 1)
    std = jnp.exp(jnp.clip(s, LOG_STD_MIN, LOG_STD_MAX))   # EUP exp
    out_ref[...] = jnp.where(lane >= std_off, std, s).astype(out_ref.dtype)


def prepare_actor_params(params):
    """One-time fold + packing (re-run only when weights change; NOT hot path).

    The Layer-2 fold (W2 @ Wm, ...) is exact only because this configuration
    applies no activation / LayerNorm / dropout after Layer_2_Linear.
    """
    w1, b1 = params["w1"], params["b1"]
    g1, be1 = params["g1"], params["be1"]
    w2, b2 = params["w2"], params["b2"]
    wm, bm = params["wm"], params["bm"]
    ws, bs = params["ws"], params["bs"]

    S, H = w1.shape
    A = wm.shape[1]
    Hp = _round_up(H, LANE)

    # Fold Layer_2_Linear into the two heads (in f32).
    wm_f = w2 @ wm                       # [H, A]
    ws_f = w2 @ ws                       # [H, A]
    bm_f = b2 @ wm + bm                  # [A]
    bs_f = b2 @ ws + bs                  # [A]

    # Pack heads: single 128-lane tile when 2*A <= 128, else two Ap-wide halves.
    if 2 * A <= LANE:
        wtot, std_off = LANE, LANE // 2
    else:
        ap = _round_up(A, LANE)
        wtot, std_off = 2 * ap, ap

    wh = jnp.zeros((Hp, wtot), jnp.float32)
    wh = wh.at[:H, :A].set(wm_f).at[:H, std_off:std_off + A].set(ws_f)
    bh = jnp.zeros((1, wtot), jnp.float32)
    bh = bh.at[0, :A].set(bm_f).at[0, std_off:std_off + A].set(bs_f)

    # Pad hidden dim to full 128-lane vregs (zeros are exact: padded h lanes
    # are 0 after ReLU, gamma/beta pads are 0, padded wh rows are 0).
    w1p = jnp.zeros((S, Hp), jnp.float32).at[:, :H].set(w1)
    b1p = jnp.zeros((1, Hp), jnp.float32).at[0, :H].set(b1)
    g1p = jnp.zeros((1, Hp), jnp.float32).at[0, :H].set(g1)
    be1p = jnp.zeros((1, Hp), jnp.float32).at[0, :H].set(be1)

    return {
        "w1": w1p.astype(jnp.bfloat16),      # bf16 MXU operands
        "wh": wh.astype(jnp.bfloat16),
        "b1": b1p, "g1": g1p, "be1": be1p,   # f32 elementwise operands
        "bh": bh,
        "S": S, "H": H, "A": A, "Hp": Hp, "wtot": wtot, "std_off": std_off,
    }


def _pick_batch_tile(B):
    """~512-row tiles, minimal padding, >= 2 grid steps when the batch allows
    so the 'parallel' axis shards across v7x's two TensorCores."""
    nt = 1 if B <= SUBLANE else max(_cdiv(B, 512), 2)
    tm = _round_up(_cdiv(B, nt), SUBLANE)
    return tm, nt


def actor_forward(x, packed, *, out_dtype=jnp.float32):
    """Actor forward from pre-packed params.  Returns (mean, std)."""
    B = x.shape[0]
    S, H, A = packed["S"], packed["H"], packed["A"]
    Hp, wtot, std_off = packed["Hp"], packed["wtot"], packed["std_off"]

    tm, nt = _pick_batch_tile(B)
    Bp = nt * tm
    xp = x if Bp == B else jnp.pad(x, ((0, Bp - B), (0, 0)))
    xp = xp.astype(jnp.bfloat16)

    def resident(shape):
        # Constant index map: weight tile DMA'd once, stays VMEM-resident.
        return pl.BlockSpec(shape, lambda i: (0, 0))

    out_isize = jnp.dtype(out_dtype).itemsize
    flops = 2 * Bp * (S * Hp + Hp * wtot)
    bytes_accessed = (2 * (Bp * S + S * Hp + Hp * wtot)       # bf16 operands
                      + 4 * (3 * Hp + wtot)                   # f32 biases / LN
                      + out_isize * Bp * wtot)                # output writeback
    cost = pl.CostEstimate(flops=flops,
                           transcendentals=Bp * (wtot + 1),
                           bytes_accessed=int(bytes_accessed))

    # Explicit scoped-VMEM budget (v5e default is only 16 MiB), sized from the
    # real footprint with headroom and clamped to stay under v7x's 64 MiB.
    weight_b = 2 * (S * Hp + Hp * wtot) + 4 * (3 * Hp + wtot)
    stream_b = 2 * (tm * S * 2) + 2 * (tm * wtot * out_isize)
    vmem_limit = int(min(max(2 * (2 * weight_b + stream_b + 8 * tm * Hp * 4),
                             32 * 1024 * 1024),
                         56 * 1024 * 1024))

    out = pl.pallas_call(
        functools.partial(actor_kernel, h_valid=H, std_off=std_off),
        out_shape=jax.ShapeDtypeStruct((Bp, wtot), out_dtype),
        grid=(nt,),
        in_specs=[
            pl.BlockSpec((tm, S), lambda i: (i, 0)),   # x, blocked on batch
            resident((S, Hp)),                         # W1 (bf16)
            resident((1, Hp)),                         # b1
            resident((1, Hp)),                         # LN gamma
            resident((1, Hp)),                         # LN beta
            resident((Hp, wtot)),                      # packed head weight (bf16)
            resident((1, wtot)),                       # packed head bias
        ],
        out_specs=pl.BlockSpec((tm, wtot), lambda i: (i, 0)),
        compiler_params=pltpu.CompilerParams(
            dimension_semantics=("parallel",),
            vmem_limit_bytes=vmem_limit),
        cost_estimate=cost,
    )(xp, packed["w1"], packed["b1"], packed["g1"], packed["be1"],
      packed["wh"], packed["bh"])

    mean = out[:B, :A].astype(jnp.float32)
    std = out[:B, std_off:std_off + A].astype(jnp.float32)
    return mean, std


def init_params(key, num_states, num_actions, hidden):
    """Deterministic synthetic parameters (shapes match the PyTorch module)."""
    ks = jax.random.split(key, 8)
    scale = 0.1
    return {
        # Layer_1_Linear: nn.Linear(num_states, hidden)
        "w1": scale * jax.random.normal(ks[0], (num_states, hidden), jnp.float32),
        "b1": scale * jax.random.normal(ks[1], (hidden,), jnp.float32),
        # Layer_1_LayerNorm(hidden)
        "g1": jnp.ones((hidden,), jnp.float32),
        "be1": jnp.zeros((hidden,), jnp.float32),
        # Layer_2_Linear: nn.Linear(hidden, hidden)
        "w2": scale * jax.random.normal(ks[2], (hidden, hidden), jnp.float32),
        "b2": scale * jax.random.normal(ks[3], (hidden,), jnp.float32),
        # action_mean: nn.Linear(hidden, num_actions)
        "wm": scale * jax.random.normal(ks[4], (hidden, num_actions), jnp.float32),
        "bm": scale * jax.random.normal(ks[5], (num_actions,), jnp.float32),
        # action_log_std: nn.Linear(hidden, num_actions)  (num_discrete == 0)
        "ws": scale * jax.random.normal(ks[6], (hidden, num_actions), jnp.float32),
        "bs": scale * jax.random.normal(ks[7], (num_actions,), jnp.float32),
    }


def reference_forward(x, p):
    """Pure-JAX f32 reference (unfused, mirrors the PyTorch forward)."""
    h = jnp.maximum(x @ p["w1"] + p["b1"], 0.0)
    mu = jnp.mean(h, axis=-1, keepdims=True)
    var = jnp.mean((h - mu) ** 2, axis=-1, keepdims=True)
    h = (h - mu) / jnp.sqrt(var + LN_EPS) * p["g1"] + p["be1"]
    h2 = h @ p["w2"] + p["b2"]
    mean = h2 @ p["wm"] + p["bm"]
    log_std = jnp.clip(h2 @ p["ws"] + p["bs"], LOG_STD_MIN, LOG_STD_MAX)
    return mean, jnp.exp(log_std)


if __name__ == "__main__":
    num_states = 16
    num_actions = 4
    hidden = 32        # num_hiddens = (32, 32) for this small synthetic instance
    batch = 8

    key = jax.random.PRNGKey(0)
    kx, kp = jax.random.split(key)
    x = jax.random.normal(kx, (batch, num_states), jnp.float32)
    params = init_params(kp, num_states, num_actions, hidden)

    packed = prepare_actor_params(params)     # offline fold/pack (not hot path)
    mean, std = actor_forward(x, packed)
    jax.block_until_ready((mean, std))

    ref_mean, ref_std = reference_forward(x, params)
    # bf16 MXU operands -> compare against the f32 reference at bf16 tolerance.
    assert jnp.allclose(mean, ref_mean, atol=3e-2, rtol=3e-2), \
        float(jnp.max(jnp.abs(mean - ref_mean)))
    assert jnp.allclose(std, ref_std, atol=3e-2, rtol=3e-2), \
        float(jnp.max(jnp.abs(std - ref_std)))

    print("KERNEL_OK")
</pallas_src>

<mosaic_0001>
module attributes {stable_mosaic.version = 11 : i64} {
  func.func @actor_kernel(%arg0: i32, %arg1: memref<8x16xbf16, #tpu.memory_space<vmem>>, %arg2: memref<16x128xbf16, #tpu.memory_space<vmem>>, %arg3: memref<1x128xf32, #tpu.memory_space<vmem>>, %arg4: memref<1x128xf32, #tpu.memory_space<vmem>>, %arg5: memref<1x128xf32, #tpu.memory_space<vmem>>, %arg6: memref<128x128xbf16, #tpu.memory_space<vmem>>, %arg7: memref<1x128xf32, #tpu.memory_space<vmem>>, %arg8: memref<8x128xf32, #tpu.memory_space<vmem>>) attributes {dimension_semantics = [#tpu.dimension_semantics<parallel>], iteration_bounds = array<i64: 1>, scalar_prefetch = 0 : i64, scratch_operands = 0 : i64, tpu.core_type = #tpu.core_type<tc>, window_params = [{transform_indices = @transform_0, window_bounds = array<i64: 8, 16>}, {pipeline_mode = #tpu.pipeline_mode<synchronous>, transform_indices = @transform_1, window_bounds = array<i64: 16, 128>}, {pipeline_mode = #tpu.pipeline_mode<synchronous>, transform_indices = @transform_2, window_bounds = array<i64: 1, 128>}, {pipeline_mode = #tpu.pipeline_mode<synchronous>, transform_indices = @transform_3, window_bounds = array<i64: 1, 128>}, {pipeline_mode = #tpu.pipeline_mode<synchronous>, transform_indices = @transform_4, window_bounds = array<i64: 1, 128>}, {pipeline_mode = #tpu.pipeline_mode<synchronous>, transform_indices = @transform_5, window_bounds = array<i64: 128, 128>}, {pipeline_mode = #tpu.pipeline_mode<synchronous>, transform_indices = @transform_6, window_bounds = array<i64: 1, 128>}, {transform_indices = @transform_7, window_bounds = array<i64: 8, 128>}]} {
    %c0 = arith.constant 0 : index
    %c0_0 = arith.constant 0 : index
    %0 = vector.load %arg1[%c0, %c0_0] : memref<8x16xbf16, #tpu.memory_space<vmem>>, vector<8x16xbf16>
    %c0_1 = arith.constant 0 : index
    %c0_2 = arith.constant 0 : index
    %1 = vector.load %arg2[%c0_1, %c0_2] : memref<16x128xbf16, #tpu.memory_space<vmem>>, vector<16x128xbf16>
    %cst = arith.constant dense<0.000000e+00> : vector<8x128xf32>
    %2 = tpu.matmul %0, %1, %cst {dimension_numbers = #tpu.dot_dimension_numbers<[1], [0], [0], [1], [0, 0, 1, 1], [], []>} : vector<8x16xbf16>, vector<16x128xbf16>, vector<8x128xf32> -> vector<8x128xf32>
    %c0_3 = arith.constant 0 : index
    %c0_4 = arith.constant 0 : index
    %3 = vector.load %arg3[%c0_3, %c0_4] : memref<1x128xf32, #tpu.memory_space<vmem>>, vector<1x128xf32>
    %4 = vector.broadcast %3 : vector<1x128xf32> to vector<8x128xf32>
    %5 = arith.addf %2, %4 : vector<8x128xf32>
    %cst_5 = arith.constant 0.000000e+00 : f32
    %6 = vector.broadcast %cst_5 : f32 to vector<8x128xf32>
    %7 = arith.maximumf %5, %6 : vector<8x128xf32>
    %cst_6 = arith.constant dense<0.000000e+00> : vector<8xf32>
    %8 = vector.multi_reduction <add>, %7, %cst_6 [1] : vector<8x128xf32> to vector<8xf32>
    %9 = vector.shape_cast %8 : vector<8xf32> to vector<8x1xf32>
    %cst_7 = arith.constant 3.125000e-02 : f32
    %10 = vector.broadcast %cst_7 : f32 to vector<8x1xf32>
    %11 = arith.mulf %9, %10 : vector<8x1xf32>
    %12 = vector.broadcast %11 : vector<8x1xf32> to vector<8x128xf32>
    %13 = arith.subf %7, %12 : vector<8x128xf32>
    %14 = tpu.iota {dimensions = array<i32: 1>} : vector<8x128xi32>
    %c32_i32 = arith.constant 32 : i32
    %15 = vector.broadcast %c32_i32 : i32 to vector<8x128xi32>
    %16 = arith.cmpi slt, %14, %15 : vector<8x128xi32>
    %cst_8 = arith.constant 0.000000e+00 : f32
    %17 = vector.broadcast %cst_8 : f32 to vector<8x128xf32>
    %18 = arith.select %16, %13, %17 : vector<8x128xi1>, vector<8x128xf32>
    %19 = arith.mulf %18, %18 : vector<8x128xf32>
    %cst_9 = arith.constant dense<0.000000e+00> : vector<8xf32>
    %20 = vector.multi_reduction <add>, %19, %cst_9 [1] : vector<8x128xf32> to vector<8xf32>
    %21 = vector.shape_cast %20 : vector<8xf32> to vector<8x1xf32>
    %cst_10 = arith.constant 3.125000e-02 : f32
    %22 = vector.broadcast %cst_10 : f32 to vector<8x1xf32>
    %23 = arith.mulf %21, %22 : vector<8x1xf32>
    %cst_11 = arith.constant 9.99999974E-6 : f32
    %24 = vector.broadcast %cst_11 : f32 to vector<8x1xf32>
    %25 = arith.addf %23, %24 : vector<8x1xf32>
    %26 = math.rsqrt %25 : vector<8x1xf32>
    %c0_12 = arith.constant 0 : index
    %c0_13 = arith.constant 0 : index
    %27 = vector.load %arg4[%c0_12, %c0_13] : memref<1x128xf32, #tpu.memory_space<vmem>>, vector<1x128xf32>
    %28 = vector.broadcast %26 : vector<8x1xf32> to vector<8x128xf32>
    %29 = vector.broadcast %27 : vector<1x128xf32> to vector<8x128xf32>
    %30 = arith.mulf %28, %29 : vector<8x128xf32>
    %31 = arith.mulf %18, %30 : vector<8x128xf32>
    %c0_14 = arith.constant 0 : index
    %c0_15 = arith.constant 0 : index
    %32 = vector.load %arg5[%c0_14, %c0_15] : memref<1x128xf32, #tpu.memory_space<vmem>>, vector<1x128xf32>
    %33 = vector.broadcast %32 : vector<1x128xf32> to vector<8x128xf32>
    %34 = arith.addf %31, %33 : vector<8x128xf32>
    %35 = arith.truncf %34 : vector<8x128xf32> to vector<8x128xbf16>
    %c0_16 = arith.constant 0 : index
    %c0_17 = arith.constant 0 : index
    %36 = vector.load %arg6[%c0_16, %c0_17] : memref<128x128xbf16, #tpu.memory_space<vmem>>, vector<128x128xbf16>
    %cst_18 = arith.constant dense<0.000000e+00> : vector<8x128xf32>
    %37 = tpu.matmul %35, %36, %cst_18 {dimension_numbers = #tpu.dot_dimension_numbers<[1], [0], [0], [1], [0, 0, 1, 1], [], []>} : vector<8x128xbf16>, vector<128x128xbf16>, vector<8x128xf32> -> vector<8x128xf32>
    %c0_19 = arith.constant 0 : index
    %c0_20 = arith.constant 0 : index
    %38 = vector.load %arg7[%c0_19, %c0_20] : memref<1x128xf32, #tpu.memory_space<vmem>>, vector<1x128xf32>
    %39 = vector.broadcast %38 : vector<1x128xf32> to vector<8x128xf32>
    %40 = arith.addf %37, %39 : vector<8x128xf32>
    %41 = tpu.iota {dimensions = array<i32: 1>} : vector<8x128xi32>
    %cst_21 = arith.constant -2.000000e+01 : f32
    %cst_22 = arith.constant 2.000000e+00 : f32
    %42 = vector.broadcast %cst_21 : f32 to vector<8x128xf32>
    %43 = arith.maximumf %42, %40 : vector<8x128xf32>
    %44 = vector.broadcast %cst_22 : f32 to vector<8x128xf32>
    %45 = arith.minimumf %44, %43 : vector<8x128xf32>
    %46 = math.exp %45 : vector<8x128xf32>
    %c64_i32 = arith.constant 64 : i32
    %47 = vector.broadcast %c64_i32 : i32 to vector<8x128xi32>
    %48 = arith.cmpi sge, %41, %47 : vector<8x128xi32>
    %49 = arith.select %48, %46, %40 : vector<8x128xi1>, vector<8x128xf32>
    %c0_23 = arith.constant 0 : index
    %c0_24 = arith.constant 0 : index
    %50 = vector.load %arg8[%c0_23, %c0_24] : memref<8x128xf32, #tpu.memory_space<vmem>>, vector<8x128xf32>
    tpu.vector_store %arg8[%c0_23, %c0_24], %49 {strides = array<i32>} : memref<8x128xf32, #tpu.memory_space<vmem>>, vector<8x128xf32>,
    return
  }
  func.func @transform_0(%arg0: i32) -> (i32, i32) {
    %c0_i32 = arith.constant 0 : i32
    %c0_i32_0 = arith.constant 0 : i32
    return %arg0, %c0_i32 : i32, i32
  }
  func.func @transform_1(%arg0: i32) -> (i32, i32) {
    %c0_i32 = arith.constant 0 : i32
    %c0_i32_0 = arith.constant 0 : i32
    %c0_i32_1 = arith.constant 0 : i32
    return %c0_i32, %c0_i32_0 : i32, i32
  }
  func.func @transform_2(%arg0: i32) -> (i32, i32) {
    %c0_i32 = arith.constant 0 : i32
    %c0_i32_0 = arith.constant 0 : i32
    %c0_i32_1 = arith.constant 0 : i32
    return %c0_i32, %c0_i32_0 : i32, i32
  }
  func.func @transform_3(%arg0: i32) -> (i32, i32) {
    %c0_i32 = arith.constant 0 : i32
    %c0_i32_0 = arith.constant 0 : i32
    %c0_i32_1 = arith.constant 0 : i32
    return %c0_i32, %c0_i32_0 : i32, i32
  }
  func.func @transform_4(%arg0: i32) -> (i32, i32) {
    %c0_i32 = arith.constant 0 : i32
    %c0_i32_0 = arith.constant 0 : i32
    %c0_i32_1 = arith.constant 0 : i32
    return %c0_i32, %c0_i32_0 : i32, i32
  }
  func.func @transform_5(%arg0: i32) -> (i32, i32) {
    %c0_i32 = arith.constant 0 : i32
    %c0_i32_0 = arith.constant 0 : i32
    %c0_i32_1 = arith.constant 0 : i32
    return %c0_i32, %c0_i32_0 : i32, i32
  }
  func.func @transform_6(%arg0: i32) -> (i32, i32) {
    %c0_i32 = arith.constant 0 : i32
    %c0_i32_0 = arith.constant 0 : i32
    %c0_i32_1 = arith.constant 0 : i32
    return %c0_i32, %c0_i32_0 : i32, i32
  }
  func.func @transform_7(%arg0: i32) -> (i32, i32) {
    %c0_i32 = arith.constant 0 : i32
    %c0_i32_0 = arith.constant 0 : i32
    return %arg0, %c0_i32 : i32, i32
  }
}

</mosaic_0001>

<llo_original>
// kernel: tpu_custom_call.1
$region0: #{tpu_custom_call.1}
  #allocation0 [shape = 'u32[]', space=smem, size = 0x4, offset = 0x4, fixed_abs, tag = 'smem constant byte address 0x4 - core index']
  #allocation1 [shape = 'u32[144,128]{1,0:T(1,128)}', space=vmem, size = 0x12000, scoped, tag = 'internal scratch']
  %s0 = inlined_call_operand.hbm [shape: bf16[8,16], index: 0, kind: input, shape index: {}]
  %s1 = inlined_call_operand.hbm [shape: bf16[16,128], index: 1, kind: input, shape index: {}]
  %s2 = inlined_call_operand.vmem [shape: f32[1,128], index: 2, kind: input, shape index: {}]
  %s3 = inlined_call_operand.vmem [shape: f32[1,128], index: 3, kind: input, shape index: {}]
  %s4 = inlined_call_operand.vmem [shape: f32[1,128], index: 4, kind: input, shape index: {}]
  %s5 = inlined_call_operand.hbm [shape: bf16[128,128], index: 5, kind: input, shape index: {}]
  %s6 = inlined_call_operand.vmem [shape: f32[1,128], index: 6, kind: input, shape index: {}]
  %s7 = inlined_call_operand.hbm [shape: f32[8,128], index: 7, kind: output, shape index: {}]
  %s8 = sld [smem:[#allocation0]]
  $region50: #{tpu_custom_call.1} parent=0
    _
  %s10 = ssub.s32 1, %s8
  %s11 = scalar_select 0, %s10, %s8
  $region1: #{tpu_custom_call.1} parent=0
    #allocation2 [shape = 'u8[2048]{0}', space=vmem, size = 0x800, scoped, tag = 'input window, operand 0, single buffered']
    #allocation3 [shape = 's32[1]{0}', space=sflag, size = 0x4, scoped, tag = 'scoped memory for tpu_custom_call.1']
    #allocation4 [shape = 's32[1]{0}', space=sflag, size = 0x4, scoped, tag = 'scoped memory for tpu_custom_call.1']
    #allocation5 [shape = 'u8[4096]{0}', space=vmem, size = 0x1000, scoped, tag = 'input window, operand 1, single buffered']
    #allocation6 [shape = 's32[1]{0}', space=sflag, size = 0x4, scoped, tag = 'scoped memory for tpu_custom_call.1']
    #allocation7 [shape = 'u8[32768]{0}', space=vmem, size = 0x8000, scoped, tag = 'input window, operand 5, single buffered']
    #allocation8 [shape = 'u8[4096]{0}', space=vmem, size = 0x1000, scoped, tag = 'output window, operand 0, single buffered']
    %12 = vsyncpa [#allocation3], 0
    %13 = vsyncpa [#allocation6], 0
    %14 = vsyncpa [#allocation4], 0
    // Predicated region
    $region2: #{tpu_custom_call.1} parent=1 // pred_check
      _
    $region3: #{tpu_custom_call.1} parent=1 // pred_check_branch
      %16 = sbr.rel (0) target = $region5
    $region4: #{tpu_custom_call.1} parent=1 // pred_region
      %s18 = ssub.s32 64, 64
      %19 = vsyncadd [#allocation3], %s18
      %s21 = sshll.u32 [#allocation2], 4
      %s22 = int_to_ptr.vmem [resolvable:$true] %s21
      %24 = dma.hbm_to_vmem [thread:$0]  %s0, 64, %s22, [#allocation3]
    $region5: #{tpu_custom_call.1} parent=1 // pred_fallthru
      _
    // Predicated region
    $region6: #{tpu_custom_call.1} parent=1 // pred_check
      _
    $region7: #{tpu_custom_call.1} parent=1 // pred_check_branch
      %26 = sbr.rel (0) target = $region9
    $region8: #{tpu_custom_call.1} parent=1 // pred_region
      %s28 = ssub.s32 128, 128
      %29 = vsyncadd [#allocation6], %s28
      %s30 = sshll.u32 [#allocation5], 4
      %s31 = int_to_ptr.vmem [resolvable:$true] %s30
      %36 = dma.hbm_to_vmem [thread:$0]  %s1, 128, %s31, [#allocation6], 64, 64, 4
    $region9: #{tpu_custom_call.1} parent=1 // pred_fallthru
      _
    // Predicated region
    $region10: #{tpu_custom_call.1} parent=1 // pred_check
      _
    $region11: #{tpu_custom_call.1} parent=1 // pred_check_branch
      %38 = sbr.rel (0) target = $region13
    $region12: #{tpu_custom_call.1} parent=1 // pred_region
      _
    $region13: #{tpu_custom_call.1} parent=1 // pred_fallthru
      _
    // Predicated region
    $region14: #{tpu_custom_call.1} parent=1 // pred_check
      _
    $region15: #{tpu_custom_call.1} parent=1 // pred_check_branch
      %40 = sbr.rel (0) target = $region17
    $region16: #{tpu_custom_call.1} parent=1 // pred_region
      _
    $region17: #{tpu_custom_call.1} parent=1 // pred_fallthru
      _
    // Predicated region
    $region18: #{tpu_custom_call.1} parent=1 // pred_check
      _
    $region19: #{tpu_custom_call.1} parent=1 // pred_check_branch
      %42 = sbr.rel (0) target = $region21
    $region20: #{tpu_custom_call.1} parent=1 // pred_region
      _
    $region21: #{tpu_custom_call.1} parent=1 // pred_fallthru
      _
    // Predicated region
    $region22: #{tpu_custom_call.1} parent=1 // pred_check
      _
    $region23: #{tpu_custom_call.1} parent=1 // pred_check_branch
      %44 = sbr.rel (0) target = $region25
    $region24: #{tpu_custom_call.1} parent=1 // pred_region
      %s46 = ssub.s32 1024, 1024
      %47 = vsyncadd [#allocation6], %s46
      %s48 = sshll.u32 [#allocation7], 4
      %s49 = int_to_ptr.vmem [resolvable:$true] %s48
      %54 = dma.hbm_to_vmem [thread:$0]  %s5, 1024, %s49, [#allocation6], 64, 64, 4
    $region25: #{tpu_custom_call.1} parent=1 // pred_fallthru
      _
    // Predicated region
    $region26: #{tpu_custom_call.1} parent=1 // pred_check
      _
    $region27: #{tpu_custom_call.1} parent=1 // pred_check_branch
      %56 = sbr.rel (0) target = $region29
    $region28: #{tpu_custom_call.1} parent=1 // pred_region
      _
    $region29: #{tpu_custom_call.1} parent=1 // pred_fallthru
      _
    // Predicated region
    $region30: #{tpu_custom_call.1} parent=1 // pred_check
      _
    $region31: #{tpu_custom_call.1} parent=1 // pred_check_branch
      %58 = sbr.rel (0) target = $region33
    $region32: #{tpu_custom_call.1} parent=1 // pred_region
      %59 = dma.done [#allocation3], 64
    $region33: #{tpu_custom_call.1} parent=1 // pred_fallthru
      _
    // Predicated region
    $region34: #{tpu_custom_call.1} parent=1 // pred_check
      _
    $region35: #{tpu_custom_call.1} parent=1 // pred_check_branch
      %61 = sbr.rel (0) target = $region37
    $region36: #{tpu_custom_call.1} parent=1 // pred_region
      %62 = dma.done [#allocation6], 128
    $region37: #{tpu_custom_call.1} parent=1 // pred_fallthru
      _
    // Predicated region
    $region38: #{tpu_custom_call.1} parent=1 // pred_check
      _
    $region39: #{tpu_custom_call.1} parent=1 // pred_check_branch
      %64 = sbr.rel (0) target = $region41
    $region40: #{tpu_custom_call.1} parent=1 // pred_region
      %65 = dma.done [#allocation6], 1024
    $region41: #{tpu_custom_call.1} parent=1 // pred_fallthru
      _
    %v67 = vld [vmem:[#allocation2] sm:$0xf]
    %v68 = vld [vmem:[#allocation5] sm:$0xf]
    %v69 = vld [vmem:[#allocation5 + $0x4] sm:$0xf]
    %v70 = vld [vmem:[%s2] sm:$0x1]
    %v72 = vlaneseq
    %v73 = vshrl.u32 %v72, 7
    %v74 = vsub.s32 0, %v73
    %v75 = vrot.slane %v70, %v74
    %v79 = vunpack.c.l.b16 %v68
    %v80 = vunpack.c.l.b16 %v69
    %v81 = vpack.c.b16 %v80, %v79
    %vm83 = vcmask 130048
    %v85 = vsel %vm83, %v67, 0
    %87 = vmatprep.subr.bf16.mxu0 0
    %88 = vmatpush1.bf16.msra.mxu0 %v81
    %89 = vmatprep.subr.bf16.mxu0 0
    %90 = vmatpush1.bf16.msra.mxu0 0
    %91 = vmatprep.subr.bf16.mxu0 0
    %92 = vmatpush1.bf16.msra.mxu0 0
    %93 = vmatprep.subr.bf16.mxu0 0
    %94 = vmatpush1.bf16.msra.mxu0 0
    %95 = vmatprep.subr.bf16.mxu0 0
    %96 = vmatpush1.bf16.msra.mxu0 0
    %97 = vmatprep.subr.bf16.mxu0 0
    %98 = vmatpush1.bf16.msra.mxu0 0
    %99 = vmatprep.subr.bf16.mxu0 0
    %100 = vmatpush1.bf16.msra.mxu0 0
    %101 = vmatprep.subr.bf16.mxu0 0
    %102 = vmatpush1.bf16.msra.mxu0 0
    %103 = vmatprep.subr.bf16.mxu0 0
    %104 = vmatpush1.bf16.msra.mxu0 0
    %105 = vmatprep.subr.bf16.mxu0 0
    %106 = vmatpush1.bf16.msra.mxu0 0
    %107 = vmatprep.subr.bf16.mxu0 0
    %108 = vmatpush1.bf16.msra.mxu0 0
    %109 = vmatprep.subr.bf16.mxu0 0
    %110 = vmatpush1.bf16.msra.mxu0 0
    %111 = vmatprep.subr.bf16.mxu0 0
    %112 = vmatpush1.bf16.msra.mxu0 0
    %113 = vmatprep.subr.bf16.mxu0 0
    %114 = vmatpush1.bf16.msra.mxu0 0
    %115 = vmatprep.subr.bf16.mxu0 0
    %116 = vmatpush1.bf16.msra.mxu0 0
    %117 = vmatprep.subr.bf16.mxu0 0
    %118 = vmatpush1.bf16.msra.mxu0 0
    %119 = vmatprep.mubr.bf16.mxu0 0
    %120 = vmatmul.mubr.bf16.gmra.mrb[0].mxu0 %v85
    %v121 = vpop.f32.mrb[0].mxu0
    %v122 = vadd.f32 %v75, %v121
    %v123 = vpop.f32.mrb[0].mxu0
    %v124 = vpop.f32.mrb[0].mxu0
    %v125 = vpop.f32.mrb[0].mxu0
    %126 = vdwg.mxu0
    %v127 = vmax.f32 %v122, 0.0
    %128 = vadd.xlane.f32.xlu0 %v127
    %v129 = vpop.xlane.xlu0 %128
    %v130 = vmul.f32 %v129, 0.03125
    %v131 = vsub.f32 %v127, %v130
    %v132 = vlaneseq
    %v133 = vand.u32 %v132, 127
    %vm134 = vcmp.lt.s32.totalorder %v133, 32
    %v135 = vsel %vm134, %v131, 0.0
    %v136 = vmul.f32 %v135, %v135
    %137 = vadd.xlane.f32.xlu0 %v136
    %v138 = vpop.xlane.xlu0 %137
    %v139 = vmul.f32 %v138, 0.03125
    %v140 = vadd.f32 %v139, 1e-05
    %v141 = vrsqrt.pop %v140
    %v142 = vld [vmem:[%s3] sm:$0x1]
    %v144 = vlaneseq
    %v145 = vshrl.u32 %v144, 7
    %v146 = vsub.s32 0, %v145
    %v147 = vrot.slane %v142, %v146
    %v149 = vmul.f32 %v141, %v147
    %v150 = vmul.f32 %v135, %v149
    %v151 = vld [vmem:[%s4] sm:$0x1]
    %v153 = vlaneseq
    %v154 = vshrl.u32 %v153, 7
    %v155 = vsub.s32 0, %v154
    %v156 = vrot.slane %v151, %v155
    %v158 = vadd.f32 %v150, %v156
    %v159 = vpack.c.bf16 %v158, %v158
    %v160 = vld [vmem:[#allocation7] sm:$0xf]
    %v161 = vld [vmem:[#allocation7 + $0x4] sm:$0xf]
    %v162 = vld [vmem:[#allocation7 + $0x8] sm:$0xf]
    %v163 = vld [vmem:[#allocation7 + $0xc] sm:$0xf]
    %v164 = vld [vmem:[#allocation7 + $0x10] sm:$0xf]
    %v165 = vld [vmem:[#allocation7 + $0x14] sm:$0xf]
    %v166 = vld [vmem:[#allocation7 + $0x18] sm:$0xf]
    %v167 = vld [vmem:[#allocation7 + $0x1c] sm:$0xf]
    %v168 = vld [vmem:[#allocation7 + $0x20] sm:$0xf]
    %v169 = vld [vmem:[#allocation7 + $0x24] sm:$0xf]
    %v170 = vld [vmem:[#allocation7 + $0x28] sm:$0xf]
    %v171 = vld [vmem:[#allocation7 + $0x2c] sm:$0xf]
    %v172 = vld [vmem:[#allocation7 + $0x30] sm:$0xf]
    %v173 = vld [vmem:[#allocation7 + $0x34] sm:$0xf]
    %v174 = vld [vmem:[#allocation7 + $0x38] sm:$0xf]
    %v175 = vld [vmem:[#allocation7 + $0x3c] sm:$0xf]
    %v176 = vld [vmem:[%s6] sm:$0x1]
    %v178 = vlaneseq
    %v179 = vshrl.u32 %v178, 7
    %v180 = vsub.s32 0, %v179
    %v181 = vrot.slane %v176, %v180
    %v199 = vunpack.c.l.b16 %v160
    %v200 = vunpack.c.l.b16 %v161
    %v201 = vunpack.c.l.b16 %v162
    %v202 = vunpack.c.l.b16 %v163
    %v203 = vunpack.c.l.b16 %v164
    %v204 = vunpack.c.l.b16 %v165
    %v205 = vunpack.c.l.b16 %v166
    %v206 = vunpack.c.l.b16 %v167
    %v207 = vunpack.c.l.b16 %v168
    %v208 = vunpack.c.l.b16 %v169
    %v209 = vunpack.c.l.b16 %v170
    %v210 = vunpack.c.l.b16 %v171
    %v211 = vunpack.c.l.b16 %v172
    %v212 = vunpack.c.l.b16 %v173
    %v213 = vunpack.c.l.b16 %v174
    %v214 = vunpack.c.l.b16 %v175
    %v215 = vpack.c.b16 %v200, %v199
    %v216 = vpack.c.b16 %v202, %v201
    %v217 = vpack.c.b16 %v204, %v203
    %v218 = vpack.c.b16 %v206, %v205
    %v219 = vpack.c.b16 %v208, %v207
    %v220 = vpack.c.b16 %v210, %v209
    %v221 = vpack.c.b16 %v212, %v211
    %v222 = vpack.c.b16 %v214, %v213
    %231 = vmatprep.subr.bf16.mxu0 0
    %232 = vmatpush1.bf16.msra.mxu0 %v215
    %233 = vmatprep.subr.bf16.mxu0 0
    %234 = vmatpush1.bf16.msra.mxu0 %v216
    %235 = vmatprep.subr.bf16.mxu0 0
    %236 = vmatpush1.bf16.msra.mxu0 %v217
    %237 = vmatprep.subr.bf16.mxu0 0
    %238 = vmatpush1.bf16.msra.mxu0 %v218
    %239 = vmatprep.subr.bf16.mxu0 0
    %240 = vmatpush1.bf16.msra.mxu0 %v219
    %241 = vmatprep.subr.bf16.mxu0 0
    %242 = vmatpush1.bf16.msra.mxu0 %v220
    %243 = vmatprep.subr.bf16.mxu0 0
    %244 = vmatpush1.bf16.msra.mxu0 %v221
    %245 = vmatprep.subr.bf16.mxu0 0
    %246 = vmatpush1.bf16.msra.mxu0 %v222
    %247 = vmatprep.subr.bf16.mxu0 0
    %248 = vmatpush1.bf16.msra.mxu0 0
    %249 = vmatprep.subr.bf16.mxu0 0
    %250 = vmatpush1.bf16.msra.mxu0 0
    %251 = vmatprep.subr.bf16.mxu0 0
    %252 = vmatpush1.bf16.msra.mxu0 0
    %253 = vmatprep.subr.bf16.mxu0 0
    %254 = vmatpush1.bf16.msra.mxu0 0
    %255 = vmatprep.subr.bf16.mxu0 0
    %256 = vmatpush1.bf16.msra.mxu0 0
    %257 = vmatprep.subr.bf16.mxu0 0
    %258 = vmatpush1.bf16.msra.mxu0 0
    %259 = vmatprep.subr.bf16.mxu0 0
    %260 = vmatpush1.bf16.msra.mxu0 0
    %261 = vmatprep.subr.bf16.mxu0 0
    %262 = vmatpush1.bf16.msra.mxu0 0
    %263 = vmatprep.mubr.bf16.mxu0 0
    %264 = vmatmul.mubr.bf16.gmra.mrb[0].mxu0 %v159
    %v265 = vpop.f32.mrb[0].mxu0
    %v266 = vadd.f32 %v181, %v265
    %v267 = vpop.f32.mrb[0].mxu0
    %v268 = vpop.f32.mrb[0].mxu0
    %v269 = vpop.f32.mrb[0].mxu0
    %270 = vdwg.mxu0
    %v271 = vmax.f32 %v266, -20.0
    %v272 = vmin.f32 %v271, 2.0
    %v273 = vmul.f32 %v272, 1.442695
    %v274 = vpow.pop %v273
    %vm275 = vcmp.ge.s32.totalorder %v133, 64
    %v276 = vsel %vm275, %v274, %v266
    %277 = vst [vmem:[#allocation8] sm:$0xff] %v276
    // Predicated region
    $region42: #{tpu_custom_call.1} parent=1 // pred_check
      _
    $region43: #{tpu_custom_call.1} parent=1 // pred_check_branch
      %279 = sbr.rel (0) target = $region45
    $region44: #{tpu_custom_call.1} parent=1 // pred_region
      %s281 = ssub.s32 128, 128
      %282 = vsyncadd [#allocation4], %s281
      %s284 = sshll.u32 [#allocation8], 4
      %s285 = int_to_ptr.vmem [resolvable:$true] %s284
      %287 = dma.vmem_to_hbm [thread:$0]  %s285, 128, %s7, [#allocation4]
    $region45: #{tpu_custom_call.1} parent=1 // pred_fallthru
      _
    // Predicated region
    $region46: #{tpu_custom_call.1} parent=1 // pred_check
      _
    $region47: #{tpu_custom_call.1} parent=1 // pred_check_branch
      %289 = sbr.rel (0) target = $region49
    $region48: #{tpu_custom_call.1} parent=1 // pred_region
      %290 = dma.done [#allocation4], 128
    $region49: #{tpu_custom_call.1} parent=1 // pred_fallthru
      _
    %291 = vsyncpa [#allocation3], 1
    %292 = vsyncpa [#allocation6], 1
    %293 = vsyncpa [#allocation4], 1

</llo_original>
